<compile_context>
chip_gen: v7x
topology: tpu7x:2x2x1
jax: 0.10.0
libtpu: 0.0.40
codegen_flags: <defaults>
</compile_context>

<pallas_src>
import jax
import jax.numpy as jnp
from jax.experimental import pallas as pl
from jax.experimental.pallas import tpu as pltpu

POOL = 4  # AvgPool2d(4)


def _l_spa_kernel(org_ref, enh_ref, a_ref, bm_ref, out_ref):
    # org_ref/enh_ref: (C, TH, W)   a_ref: (THP, C*TH)   bm_ref: (W, WP)
    # out_ref: (HP, WP) -- VMEM-resident across the row-tile grid axis.
    k = pl.program_id(1)
    c, th, w = org_ref.shape
    thp = a_ref.shape[0]
    hp, wp = out_ref.shape

    # Upcast after the DMA (inputs may be bf16 to halve HBM bytes).
    diff = org_ref[...].astype(jnp.float32) - enh_ref[...].astype(jnp.float32)
    diff2d = diff.reshape(c * th, w)

    # Channel mean + 4x4 average pool of (org - enhance), fused into a single
    # MXU chain: A' carries the 1/(4*C) factors, Bm the 1/4 factors.
    pooled = jnp.dot(
        jnp.dot(a_ref[...], diff2d, preferred_element_type=jnp.float32),
        bm_ref[...],
        preferred_element_type=jnp.float32,
    )  # (THP, WP)

    # Accumulate this tile's pooled rows into the resident output block.
    out_ref[pl.ds(k * thp, thp), :] = pooled

    @pl.when(k == pl.num_programs(1) - 1)
    def _():
        d = out_ref[...]  # fully accumulated (HP, WP) pooled difference

        # The four directional-difference convs reduce to zero-padded unit
        # shifts of d.  Express each shift as a tiny 0/1 matmul so the work
        # lands on the idle MXU (no scratch pad, no masked unaligned stores).
        rw = jax.lax.broadcasted_iota(jnp.int32, (wp, wp), 0)
        cw = jax.lax.broadcasted_iota(jnp.int32, (wp, wp), 1)
        shift_l = (rw == cw - 1).astype(jnp.float32)   # d @ shift_l -> d[i, j-1]
        shift_r = (rw == cw + 1).astype(jnp.float32)   # d @ shift_r -> d[i, j+1]
        rh = jax.lax.broadcasted_iota(jnp.int32, (hp, hp), 0)
        ch = jax.lax.broadcasted_iota(jnp.int32, (hp, hp), 1)
        shift_u = (ch == rh - 1).astype(jnp.float32)   # shift_u @ d -> d[i-1, j]
        shift_d = (ch == rh + 1).astype(jnp.float32)   # shift_d @ d -> d[i+1, j]

        d_left = jnp.dot(d, shift_l, preferred_element_type=jnp.float32)
        d_right = jnp.dot(d, shift_r, preferred_element_type=jnp.float32)
        d_up = jnp.dot(shift_u, d, preferred_element_type=jnp.float32)
        d_down = jnp.dot(shift_d, d, preferred_element_type=jnp.float32)

        out_ref[...] = ((d - d_left) ** 2 + (d - d_right) ** 2
                        + (d - d_up) ** 2 + (d - d_down) ** 2)


def _pick_tile_h(h, c, w, itemsize):
    """Largest row tile TH that divides H, keeps one (C, TH, W) input block
    under ~2 MiB (double-buffered blocks then fit even v7x's 64 MiB VMEM and
    the pipeline gets many steps), and is either the full H or a multiple of
    32 (so TH/4 pooled rows stay sublane aligned when stored)."""
    budget = 2 * 1024 * 1024
    step = 8 * POOL  # 32
    candidates = [h] + [t for t in range(step, h, step) if h % t == 0]
    within = [t for t in candidates if c * t * w * itemsize <= budget]
    if within:
        return max(within)
    return min(candidates)


def l_spa(org, enhance, *, tile_h=None):
    """Pallas TPU implementation of L_spa.forward(org, enhance).

    Accepts float32 or bfloat16 inputs (bf16 halves HBM traffic; arithmetic is
    always f32 inside the kernel).  Returns float32 (B, 1, H//4, W//4).
    NOTE: throughput is best for W >= 128 (full vreg lanes); smaller widths run
    correctly but are lane-masked.
    """
    assert org.shape == enhance.shape
    b, c, h, w = org.shape
    assert h % POOL == 0 and w % POOL == 0
    hp, wp = h // POOL, w // POOL

    if tile_h is None:
        tile_h = _pick_tile_h(h, c, w, jnp.dtype(org.dtype).itemsize)
    assert h % tile_h == 0 and tile_h % POOL == 0
    assert tile_h == h or tile_h % (8 * POOL) == 0
    n_row_tiles = h // tile_h
    thp = tile_h // POOL

    # A' fuses the channel mean (1/C) and the 4-row average for one (C, TH, W)
    # tile viewed as (C*TH, W):  A'[p, c*TH + r] = 1/(4C)  iff  r // 4 == p.
    row_in_tile = jnp.arange(c * tile_h) % tile_h
    a_mat = (row_in_tile[None, :] // POOL == jnp.arange(thp)[:, None]).astype(
        jnp.float32) / float(POOL * c)                     # (THP, C*TH)
    # Bm is the 4-wide column average:  Bm[w, q] = 1/4  iff  w // 4 == q.
    b_mat = (jnp.arange(w)[:, None] // POOL == jnp.arange(wp)[None, :]).astype(
        jnp.float32) / float(POOL)                         # (W, WP)

    out = pl.pallas_call(
        _l_spa_kernel,
        out_shape=jax.ShapeDtypeStruct((b, hp, wp), jnp.float32),
        grid_spec=pltpu.PrefetchScalarGridSpec(
            num_scalar_prefetch=0,
            grid=(b, n_row_tiles),
            in_specs=[
                pl.BlockSpec((None, c, tile_h, w), lambda i, k: (i, 0, k, 0)),
                pl.BlockSpec((None, c, tile_h, w), lambda i, k: (i, 0, k, 0)),
                pl.BlockSpec((thp, c * tile_h), lambda i, k: (0, 0)),
                pl.BlockSpec((w, wp), lambda i, k: (0, 0)),
            ],
            out_specs=pl.BlockSpec((None, hp, wp), lambda i, k: (i, 0, 0)),
        ),
        compiler_params=pltpu.CompilerParams(
            # batch axis -> megacore / dual-TC sharding; the row-tile axis
            # carries the resident-output accumulation so it stays "arbitrary".
            dimension_semantics=("parallel", "arbitrary"),
        ),
    )(org, enhance, a_mat, b_mat)

    # TODO(synk): output width Wp is usually < 128 lanes; a lane-dense packed
    # output layout would avoid the (tiny) masked final store but needs extra
    # wrapper-side reshuffling, so it is left as-is.
    return out.reshape(b, 1, hp, wp)


def _l_spa_reference(org, enhance):
    """Pure-JAX reference mirroring the PyTorch forward (dead code omitted)."""
    om = jnp.mean(org.astype(jnp.float32), axis=1, keepdims=True)
    em = jnp.mean(enhance.astype(jnp.float32), axis=1, keepdims=True)

    def pool(x):
        bb, cc, hh, ww = x.shape
        return x.reshape(bb, cc, hh // POOL, POOL, ww // POOL, POOL).mean(axis=(3, 5))

    d = pool(om) - pool(em)
    dp = jnp.pad(d, ((0, 0), (0, 0), (1, 1), (1, 1)))
    dc = dp[:, :, 1:-1, 1:-1]
    dl = dp[:, :, 1:-1, 0:-2]
    dr = dp[:, :, 1:-1, 2:]
    du = dp[:, :, 0:-2, 1:-1]
    dd = dp[:, :, 2:, 1:-1]
    return (dc - dl) ** 2 + (dc - dr) ** 2 + (dc - du) ** 2 + (dc - dd) ** 2


if __name__ == "__main__":
    key = jax.random.PRNGKey(0)
    k1, k2, k3, k4 = jax.random.split(key, 4)

    # Primary check: small shape consistent with the module (single row tile).
    B, C, H, W = 2, 4, 16, 16
    org = jax.random.uniform(k1, (B, C, H, W), dtype=jnp.float32)
    enh = jax.random.uniform(k2, (B, C, H, W), dtype=jnp.float32)
    out = jax.block_until_ready(l_spa(org, enh))
    ref = _l_spa_reference(org, enh)
    assert out.shape == (B, 1, H // POOL, W // POOL)
    assert jnp.allclose(out, ref, atol=1e-5, rtol=1e-5), "mismatch (single tile)"

    # Secondary check: exercise the multi-row-tile accumulation path.
    B2, C2, H2, W2 = 2, 4, 64, 16
    org2 = jax.random.uniform(k3, (B2, C2, H2, W2), dtype=jnp.float32)
    enh2 = jax.random.uniform(k4, (B2, C2, H2, W2), dtype=jnp.float32)
    out2 = jax.block_until_ready(l_spa(org2, enh2, tile_h=32))
    ref2 = _l_spa_reference(org2, enh2)
    assert out2.shape == (B2, 1, H2 // POOL, W2 // POOL)
    assert jnp.allclose(out2, ref2, atol=1e-5, rtol=1e-5), "mismatch (multi tile)"

    print("KERNEL_OK")
</pallas_src>

<mosaic_0001>
module attributes {stable_mosaic.version = 11 : i64} {
  func.func @_l_spa_kernel(%arg0: i32, %arg1: i32, %arg2: memref<1x4x16x16xf32, #tpu.memory_space<vmem>>, %arg3: memref<1x4x16x16xf32, #tpu.memory_space<vmem>>, %arg4: memref<4x64xf32, #tpu.memory_space<vmem>>, %arg5: memref<16x4xf32, #tpu.memory_space<vmem>>, %arg6: memref<1x4x4xf32, #tpu.memory_space<vmem>>) attributes {dimension_semantics = [#tpu.dimension_semantics<parallel>, #tpu.dimension_semantics<arbitrary>], iteration_bounds = array<i64: 2, 1>, scalar_prefetch = 0 : i64, scratch_operands = 0 : i64, tpu.core_type = #tpu.core_type<tc>, window_params = [{transform_indices = @transform_0, window_bounds = array<i64: 1, 4, 16, 16>}, {transform_indices = @transform_1, window_bounds = array<i64: 1, 4, 16, 16>}, {pipeline_mode = #tpu.pipeline_mode<synchronous>, transform_indices = @transform_2, window_bounds = array<i64: 4, 64>}, {pipeline_mode = #tpu.pipeline_mode<synchronous>, transform_indices = @transform_3, window_bounds = array<i64: 16, 4>}, {transform_indices = @transform_4, window_bounds = array<i64: 1, 4, 4>}]} {
    %c0 = arith.constant 0 : index
    %c0_0 = arith.constant 0 : index
    %c0_1 = arith.constant 0 : index
    %c0_2 = arith.constant 0 : index
    %0 = vector.load %arg2[%c0, %c0_0, %c0_1, %c0_2] : memref<1x4x16x16xf32, #tpu.memory_space<vmem>>, vector<1x4x16x16xf32>
    %1 = vector.shape_cast %0 : vector<1x4x16x16xf32> to vector<4x16x16xf32>
    %c0_3 = arith.constant 0 : index
    %c0_4 = arith.constant 0 : index
    %c0_5 = arith.constant 0 : index
    %c0_6 = arith.constant 0 : index
    %2 = vector.load %arg3[%c0_3, %c0_4, %c0_5, %c0_6] : memref<1x4x16x16xf32, #tpu.memory_space<vmem>>, vector<1x4x16x16xf32>
    %3 = vector.shape_cast %2 : vector<1x4x16x16xf32> to vector<4x16x16xf32>
    %4 = arith.subf %1, %3 : vector<4x16x16xf32>
    %5 = vector.shape_cast %4 : vector<4x16x16xf32> to vector<64x16xf32>
    %c0_7 = arith.constant 0 : index
    %c0_8 = arith.constant 0 : index
    %6 = vector.load %arg4[%c0_7, %c0_8] : memref<4x64xf32, #tpu.memory_space<vmem>>, vector<4x64xf32>
    %cst = arith.constant dense<0.000000e+00> : vector<4x16xf32>
    %7 = tpu.matmul %6, %5, %cst {dimension_numbers = #tpu.dot_dimension_numbers<[1], [0], [0], [1], [0, 0, 1, 1], [], []>} : vector<4x64xf32>, vector<64x16xf32>, vector<4x16xf32> -> vector<4x16xf32>
    %c0_9 = arith.constant 0 : index
    %c0_10 = arith.constant 0 : index
    %8 = vector.load %arg5[%c0_9, %c0_10] : memref<16x4xf32, #tpu.memory_space<vmem>>, vector<16x4xf32>
    %cst_11 = arith.constant dense<0.000000e+00> : vector<4x4xf32>
    %9 = tpu.matmul %7, %8, %cst_11 {dimension_numbers = #tpu.dot_dimension_numbers<[1], [0], [0], [1], [0, 0, 1, 1], [], []>} : vector<4x16xf32>, vector<16x4xf32>, vector<4x4xf32> -> vector<4x4xf32>
    %c4_i32 = arith.constant 4 : i32
    %10 = arith.muli %arg1, %c4_i32 : i32
    %c0_12 = arith.constant 0 : index
    %11 = arith.index_cast %10 : i32 to index
    %c0_13 = arith.constant 0 : index
    %12 = vector.load %arg6[%c0_12, %11, %c0_13] : memref<1x4x4xf32, #tpu.memory_space<vmem>>, vector<1x4x4xf32>
    %13 = vector.shape_cast %12 : vector<1x4x4xf32> to vector<4x4xf32>
    %14 = vector.shape_cast %9 : vector<4x4xf32> to vector<1x4x4xf32>
    tpu.vector_store %arg6[%c0_12, %11, %c0_13], %14 {strides = array<i32>} : memref<1x4x4xf32, #tpu.memory_space<vmem>>, vector<1x4x4xf32>,
    %c0_i32 = arith.constant 0 : i32
    %15 = arith.cmpi eq, %arg1, %c0_i32 : i32
    %16 = arith.extui %15 : i1 to i32
    %c0_i32_14 = arith.constant 0 : i32
    %17 = arith.cmpi ne, %16, %c0_i32_14 : i32
    scf.if %17 {
      %c0_15 = arith.constant 0 : index
      %c0_16 = arith.constant 0 : index
      %c0_17 = arith.constant 0 : index
      %18 = vector.load %arg6[%c0_15, %c0_16, %c0_17] : memref<1x4x4xf32, #tpu.memory_space<vmem>>, vector<1x4x4xf32>
      %19 = vector.shape_cast %18 : vector<1x4x4xf32> to vector<4x4xf32>
      %20 = tpu.iota {dimensions = array<i32: 0>} : vector<4x4xi32>
      %21 = tpu.iota {dimensions = array<i32: 1>} : vector<4x4xi32>
      %c1_i32 = arith.constant 1 : i32
      %22 = vector.broadcast %c1_i32 : i32 to vector<4x4xi32>
      %23 = arith.subi %21, %22 : vector<4x4xi32>
      %24 = arith.cmpi eq, %20, %23 : vector<4x4xi32>
      %25 = arith.extui %24 : vector<4x4xi1> to vector<4x4xi32>
      %26 = arith.sitofp %25 : vector<4x4xi32> to vector<4x4xf32>
      %c1_i32_18 = arith.constant 1 : i32
      %27 = vector.broadcast %c1_i32_18 : i32 to vector<4x4xi32>
      %28 = arith.addi %21, %27 : vector<4x4xi32>
      %29 = arith.cmpi eq, %20, %28 : vector<4x4xi32>
      %30 = arith.extui %29 : vector<4x4xi1> to vector<4x4xi32>
      %31 = arith.sitofp %30 : vector<4x4xi32> to vector<4x4xf32>
      %32 = tpu.iota {dimensions = array<i32: 0>} : vector<4x4xi32>
      %33 = tpu.iota {dimensions = array<i32: 1>} : vector<4x4xi32>
      %c1_i32_19 = arith.constant 1 : i32
      %34 = vector.broadcast %c1_i32_19 : i32 to vector<4x4xi32>
      %35 = arith.subi %32, %34 : vector<4x4xi32>
      %36 = arith.cmpi eq, %33, %35 : vector<4x4xi32>
      %37 = arith.extui %36 : vector<4x4xi1> to vector<4x4xi32>
      %38 = arith.sitofp %37 : vector<4x4xi32> to vector<4x4xf32>
      %c1_i32_20 = arith.constant 1 : i32
      %39 = vector.broadcast %c1_i32_20 : i32 to vector<4x4xi32>
      %40 = arith.addi %32, %39 : vector<4x4xi32>
      %41 = arith.cmpi eq, %33, %40 : vector<4x4xi32>
      %42 = arith.extui %41 : vector<4x4xi1> to vector<4x4xi32>
      %43 = arith.sitofp %42 : vector<4x4xi32> to vector<4x4xf32>
      %cst_21 = arith.constant dense<0.000000e+00> : vector<4x4xf32>
      %44 = tpu.matmul %19, %26, %cst_21 {dimension_numbers = #tpu.dot_dimension_numbers<[1], [0], [0], [1], [0, 0, 1, 1], [], []>} : vector<4x4xf32>, vector<4x4xf32>, vector<4x4xf32> -> vector<4x4xf32>
      %cst_22 = arith.constant dense<0.000000e+00> : vector<4x4xf32>
      %45 = tpu.matmul %19, %31, %cst_22 {dimension_numbers = #tpu.dot_dimension_numbers<[1], [0], [0], [1], [0, 0, 1, 1], [], []>} : vector<4x4xf32>, vector<4x4xf32>, vector<4x4xf32> -> vector<4x4xf32>
      %cst_23 = arith.constant dense<0.000000e+00> : vector<4x4xf32>
      %46 = tpu.matmul %38, %19, %cst_23 {dimension_numbers = #tpu.dot_dimension_numbers<[1], [0], [0], [1], [0, 0, 1, 1], [], []>} : vector<4x4xf32>, vector<4x4xf32>, vector<4x4xf32> -> vector<4x4xf32>
      %cst_24 = arith.constant dense<0.000000e+00> : vector<4x4xf32>
      %47 = tpu.matmul %43, %19, %cst_24 {dimension_numbers = #tpu.dot_dimension_numbers<[1], [0], [0], [1], [0, 0, 1, 1], [], []>} : vector<4x4xf32>, vector<4x4xf32>, vector<4x4xf32> -> vector<4x4xf32>
      %48 = arith.subf %19, %44 : vector<4x4xf32>
      %49 = arith.mulf %48, %48 : vector<4x4xf32>
      %50 = arith.subf %19, %45 : vector<4x4xf32>
      %51 = arith.mulf %50, %50 : vector<4x4xf32>
      %52 = arith.addf %49, %51 : vector<4x4xf32>
      %53 = arith.subf %19, %46 : vector<4x4xf32>
      %54 = arith.mulf %53, %53 : vector<4x4xf32>
      %55 = arith.addf %52, %54 : vector<4x4xf32>
      %56 = arith.subf %19, %47 : vector<4x4xf32>
      %57 = arith.mulf %56, %56 : vector<4x4xf32>
      %58 = arith.addf %55, %57 : vector<4x4xf32>
      %c0_25 = arith.constant 0 : index
      %c0_26 = arith.constant 0 : index
      %c0_27 = arith.constant 0 : index
      %59 = vector.load %arg6[%c0_25, %c0_26, %c0_27] : memref<1x4x4xf32, #tpu.memory_space<vmem>>, vector<1x4x4xf32>
      %60 = vector.shape_cast %59 : vector<1x4x4xf32> to vector<4x4xf32>
      %61 = vector.shape_cast %58 : vector<4x4xf32> to vector<1x4x4xf32>
      tpu.vector_store %arg6[%c0_25, %c0_26, %c0_27], %61 {strides = array<i32>} : memref<1x4x4xf32, #tpu.memory_space<vmem>>, vector<1x4x4xf32>,
    } else {
    }
    return
  }
  func.func @transform_0(%arg0: i32, %arg1: i32) -> (i32, i32, i32, i32) {
    %c0_i32 = arith.constant 0 : i32
    %c0_i32_0 = arith.constant 0 : i32
    %c0_i32_1 = arith.constant 0 : i32
    return %arg0, %c0_i32, %arg1, %c0_i32_0 : i32, i32, i32, i32
  }
  func.func @transform_1(%arg0: i32, %arg1: i32) -> (i32, i32, i32, i32) {
    %c0_i32 = arith.constant 0 : i32
    %c0_i32_0 = arith.constant 0 : i32
    %c0_i32_1 = arith.constant 0 : i32
    return %arg0, %c0_i32, %arg1, %c0_i32_0 : i32, i32, i32, i32
  }
  func.func @transform_2(%arg0: i32, %arg1: i32) -> (i32, i32) {
    %c0_i32 = arith.constant 0 : i32
    %c0_i32_0 = arith.constant 0 : i32
    %c0_i32_1 = arith.constant 0 : i32
    return %c0_i32, %c0_i32_0 : i32, i32
  }
  func.func @transform_3(%arg0: i32, %arg1: i32) -> (i32, i32) {
    %c0_i32 = arith.constant 0 : i32
    %c0_i32_0 = arith.constant 0 : i32
    %c0_i32_1 = arith.constant 0 : i32
    return %c0_i32, %c0_i32_0 : i32, i32
  }
  func.func @transform_4(%arg0: i32, %arg1: i32) -> (i32, i32, i32) {
    %c0_i32 = arith.constant 0 : i32
    %c0_i32_0 = arith.constant 0 : i32
    %c0_i32_1 = arith.constant 0 : i32
    return %arg0, %c0_i32, %c0_i32_0 : i32, i32, i32
  }
}

</mosaic_0001>

<llo_original>
// kernel: tpu_custom_call.1
$region0: #{tpu_custom_call.1}
  #allocation0 [shape = 'u32[]', space=smem, size = 0x4, offset = 0x4, fixed_abs, tag = 'smem constant byte address 0x4 - core index']
  #allocation1 [shape = 'u32[144,128]{1,0:T(1,128)}', space=vmem, size = 0x12000, scoped, tag = 'internal scratch']
  %s0 = inlined_call_operand.hbm [shape: f32[2,4,16,16], index: 0, kind: input, shape index: {}]
  %s1 = inlined_call_operand.hbm [shape: f32[2,4,16,16], index: 1, kind: input, shape index: {}]
  %s2 = inlined_call_operand.vmem [shape: f32[4,64], index: 2, kind: input, shape index: {}]
  %s3 = inlined_call_operand.vmem [shape: f32[16,4], index: 3, kind: input, shape index: {}]
  %s4 = inlined_call_operand.hbm [shape: f32[2,4,4], index: 4, kind: output, shape index: {}]
  %s5 = sld [smem:[#allocation0]]
  $region61: #{tpu_custom_call.1} parent=0
    _
  %s7 = ssub.s32 1, %s5
  %s8 = scalar_select 0, %s7, %s5
  $region1: #{tpu_custom_call.1} parent=0
    #allocation2 [shape = 'u8[65536]{0}', space=vmem, size = 0x10000, scoped, tag = 'input window, operand 0']
    #allocation3 [shape = 's32[2]{0}', space=sflag, size = 0x8, scoped, tag = 'scoped memory for tpu_custom_call.1']
    #allocation4 [shape = 's32[2]{0}', space=sflag, size = 0x8, scoped, tag = 'scoped memory for tpu_custom_call.1']
    #allocation5 [shape = 'u8[65536]{0}', space=vmem, size = 0x10000, scoped, tag = 'input window, operand 1']
    #allocation6 [shape = 's32[2]{0}', space=sflag, size = 0x8, scoped, tag = 'scoped memory for tpu_custom_call.1']
    #allocation7 [shape = 'u8[4096]{0}', space=vmem, size = 0x1000, scoped, tag = 'output window, operand 0']
    %9 = vsyncpa [#allocation3], 0
    %s10 = scalar_lea.sflag [#allocation3], 1
    %11 = vsyncpa %s10, 0
    %12 = vsyncpa [#allocation6], 0
    %s13 = scalar_lea.sflag [#allocation6], 1
    %14 = vsyncpa %s13, 0
    %15 = vsyncpa [#allocation4], 0
    %s16 = scalar_lea.sflag [#allocation4], 1
    %17 = vsyncpa %s16, 0
    loop: start=0, step=1, limit=4
    $region2: #{tpu_custom_call.1} parent=1 // loop_pre_header
      _
    $region3: #{tpu_custom_call.1} parent=1 // loop_header
      %s19 = sphi 0, %s23
      %p20 = scmp.ge.s32.totalorder %s19, 4
      %s26 = sphi 0, %s38
      %s27 = sphi 0, %s34
      %s28 = sphi 0, %s26
      %s29 = sphi 0, %s27
      %s30 = sphi 0, %s28
      %s31 = sphi 0, %s29
      %s43 = sphi 0, %s45
      %s46 = sphi 0, %s43
      %s47 = sphi 0, %s46
      %s63 = sphi 0, %s47
      %s71 = sphi 0, %s73
      %s74 = sphi 0, %s71
      %s75 = sphi 0, %s74
      %s91 = sphi 0, %s75
      %s95 = sphi 0, %s95
      %s97 = sphi 0, %s95
      %s98 = sphi 0, %s97
      %s112 = sphi 0, %s98
      %s116 = sphi 0, %s116
      %s118 = sphi 0, %s116
      %s119 = sphi 0, %s118
      %s133 = sphi 0, %s119
      %s139 = sphi 0, %s141
      %s142 = sphi 0, %s139
      %s143 = sphi 0, %s142
      %s159 = sphi 0, %s143
    $region4: #{tpu_custom_call.1} parent=1 // loop_header_branch
      %22 = sbr.rel (%p20) target = $region8
    $region5: #{tpu_custom_call.1} parent=1 // loop_body
      %s24 = ssub.s32 %s19, 1
      %s25 = ssub.s32 %s19, 2
      %s32 = sadd.s32 1, %s27
      %p33 = scmp.ge.s32.totalorder %s32, 1
      %s34 = scalar_select %p33, 0, %s32
      %s35 = sadd.s32 1, %s26
      %s36 = scalar_select %p33, %s35, %s26
      %p37 = scmp.ge.s32.totalorder %s36, 2
      %s38 = scalar_select %p37, 0, %s36
      %s39 = ssub.s32 %s26, %s38
      %s40 = ssub.s32 %s27, %s34
      %s41 = sor.u32 %s39, %s40
      %p42 = scmp.eq.s32.totalorder %s41, 0
      %s44 = sadd.s32 %s43, 1
      %s45 = scalar_select %p42, %s43, %s44
      %p48 = pneg %p42
      %p49 = scmp.eq.s32.totalorder %s19, 1
      %p50 = por %p48, %p49
      %p51 = scmp.ne.s32.totalorder %s43, %s46
      %p52 = scmp.eq.s32.totalorder %s19, 0
      %p53 = por %p51, %p52
      %p54 = scmp.ne.s32.totalorder %s43, %s46
      %p55 = scmp.eq.s32.totalorder %s24, 1
      %p56 = por %p54, %p55
      %p57 = scmp.ne.s32.totalorder %s46, %s47
      %p58 = scmp.eq.s32.totalorder %s24, 0
      %p59 = por %p57, %p58
      %p60 = scmp.ne.s32.totalorder %s46, %s47
      %p61 = scmp.eq.s32.totalorder %s25, 1
      %p62 = por %p60, %p61
      %p64 = scmp.ne.s32.totalorder %s47, %s63
      %p65 = scmp.eq.s32.totalorder %s25, 0
      %p66 = por %p64, %p65
      %s67 = ssub.s32 %s26, %s38
      %s68 = ssub.s32 %s27, %s34
      %s69 = sor.u32 %s67, %s68
      %p70 = scmp.eq.s32.totalorder %s69, 0
      %s72 = sadd.s32 %s71, 1
      %s73 = scalar_select %p70, %s71, %s72
      %p76 = pneg %p70
      %p77 = scmp.eq.s32.totalorder %s19, 1
      %p78 = por %p76, %p77
      %p79 = scmp.ne.s32.totalorder %s71, %s74
      %p80 = scmp.eq.s32.totalorder %s19, 0
      %p81 = por %p79, %p80
      %p82 = scmp.ne.s32.totalorder %s71, %s74
      %p83 = scmp.eq.s32.totalorder %s24, 1
      %p84 = por %p82, %p83
      %p85 = scmp.ne.s32.totalorder %s74, %s75
      %p86 = scmp.eq.s32.totalorder %s24, 0
      %p87 = por %p85, %p86
      %p88 = scmp.ne.s32.totalorder %s74, %s75
      %p89 = scmp.eq.s32.totalorder %s25, 1
      %p90 = por %p88, %p89
      %p92 = scmp.ne.s32.totalorder %s75, %s91
      %p93 = scmp.eq.s32.totalorder %s25, 0
      %p94 = por %p92, %p93
      %s96 = sadd.s32 %s95, 1
      %p99 = scmp.eq.s32.totalorder %s19, 1
      %p100 = scmp.ne.s32.totalorder %s95, %s97
      %p101 = scmp.eq.s32.totalorder %s19, 0
      %p102 = por %p100, %p101
      %p103 = scmp.ne.s32.totalorder %s95, %s97
      %p104 = scmp.eq.s32.totalorder %s24, 1
      %p105 = por %p103, %p104
      %p106 = scmp.ne.s32.totalorder %s97, %s98
      %p107 = scmp.eq.s32.totalorder %s24, 0
      %p108 = por %p106, %p107
      %p109 = scmp.ne.s32.totalorder %s97, %s98
      %p110 = scmp.eq.s32.totalorder %s25, 1
      %p111 = por %p109, %p110
      %p113 = scmp.ne.s32.totalorder %s98, %s112
      %p114 = scmp.eq.s32.totalorder %s25, 0
      %p115 = por %p113, %p114
      %s117 = sadd.s32 %s116, 1
      %p120 = scmp.eq.s32.totalorder %s19, 1
      %p121 = scmp.ne.s32.totalorder %s116, %s118
      %p122 = scmp.eq.s32.totalorder %s19, 0
      %p123 = por %p121, %p122
      %p124 = scmp.ne.s32.totalorder %s116, %s118
      %p125 = scmp.eq.s32.totalorder %s24, 1
      %p126 = por %p124, %p125
      %p127 = scmp.ne.s32.totalorder %s118, %s119
      %p128 = scmp.eq.s32.totalorder %s24, 0
      %p129 = por %p127, %p128
      %p130 = scmp.ne.s32.totalorder %s118, %s119
      %p131 = scmp.eq.s32.totalorder %s25, 1
      %p132 = por %p130, %p131
      %p134 = scmp.ne.s32.totalorder %s119, %s133
      %p135 = scmp.eq.s32.totalorder %s25, 0
      %p136 = por %p134, %p135
      %s137 = ssub.s32 %s26, %s38
      %p138 = scmp.eq.s32.totalorder %s137, 0
      %s140 = sadd.s32 %s139, 1
      %s141 = scalar_select %p138, %s139, %s140
      %p144 = pneg %p138
      %p145 = scmp.eq.s32.totalorder %s19, 1
      %p146 = por %p144, %p145
      %p147 = scmp.ne.s32.totalorder %s139, %s142
      %p148 = scmp.eq.s32.totalorder %s19, 0
      %p149 = por %p147, %p148
      %p150 = scmp.ne.s32.totalorder %s139, %s142
      %p151 = scmp.eq.s32.totalorder %s24, 1
      %p152 = por %p150, %p151
      %p153 = scmp.ne.s32.totalorder %s142, %s143
      %p154 = scmp.eq.s32.totalorder %s24, 0
      %p155 = por %p153, %p154
      %p156 = scmp.ne.s32.totalorder %s142, %s143
      %p157 = scmp.eq.s32.totalorder %s25, 1
      %p158 = por %p156, %p157
      %p160 = scmp.ne.s32.totalorder %s143, %s159
      %p161 = scmp.eq.s32.totalorder %s25, 0
      %p162 = por %p160, %p161
      %p163 = scmp.le.s32.totalorder 1, %s19
      %p164 = scmp.lt.s32.totalorder %s19, 3
      %p165 = pnand %p163, %p164
      %p166 = pneg %p165
      // Predicated region
      $region9: #{tpu_custom_call.1} parent=5 // pred_check
        _
      $region10: #{tpu_custom_call.1} parent=5 // pred_check_branch
        %168 = sbr.rel (%p165) target = $region12
      $region11: #{tpu_custom_call.1} parent=5 // pred_region
        %s169 = ssub.s32 %s19, 1
        // Predicated region
        $region13: #{tpu_custom_call.1} parent=11 // pred_check
          %p170 = pneg %p108
        $region14: #{tpu_custom_call.1} parent=11 // pred_check_branch
          %172 = sbr.rel (%p170) target = $region16
        $region15: #{tpu_custom_call.1} parent=11 // pred_region
          _
        $region16: #{tpu_custom_call.1} parent=11 // pred_fallthru
          _
        // Predicated region
        $region17: #{tpu_custom_call.1} parent=11 // pred_check
          %p173 = pneg %p129
        $region18: #{tpu_custom_call.1} parent=11 // pred_check_branch
          %175 = sbr.rel (%p173) target = $region20
        $region19: #{tpu_custom_call.1} parent=11 // pred_region
          _
        $region20: #{tpu_custom_call.1} parent=11 // pred_fallthru
          _
      $region12: #{tpu_custom_call.1} parent=5 // pred_fallthru
        _
      %p176 = scmp.lt.s32.totalorder %s19, 2
      // Predicated region
      $region21: #{tpu_custom_call.1} parent=5 // pred_check
        %p177 = pneg %p176
      $region22: #{tpu_custom_call.1} parent=5 // pred_check_branch
        %179 = sbr.rel (%p177) target = $region24
      $region23: #{tpu_custom_call.1} parent=5 // pred_region
        // Predicated region
        $region25: #{tpu_custom_call.1} parent=23 // pred_check
          %p180 = pneg %p53
        $region26: #{tpu_custom_call.1} parent=23 // pred_check_branch
          %182 = sbr.rel (%p180) target = $region28
        $region27: #{tpu_custom_call.1} parent=23 // pred_region
          %s183 = sand.u32 %s43, 1
          %s184 = scalar_lea.sflag [#allocation3], %s183
          %s185 = sand.u32 %s43, 1
          %s186 = smul.addr %s185, 64
          %s187 = scalar_lea.vmem [#allocation2], %s186
          %s188 = smul.u32 2, %s27
          %s190 = ssub.s32 1024, 1024
          %191 = vsyncadd %s184, %s190
          %s192 = smul.addr %s26, 8
          %s193 = sadd.s32 %s188, %s192
          %s194 = smul.addr %s193, 128
          %s195 = scalar_lea.hbm %s0, %s194
          %s196 = sshll.u32 %s187, 4
          %s197 = int_to_ptr.vmem [resolvable:$true] %s196
          %202 = dma.hbm_to_vmem [thread:$0]  %s195, 1024, %s197, %s184, 128, 128, 8
        $region28: #{tpu_custom_call.1} parent=23 // pred_fallthru
          _
        // Predicated region
        $region29: #{tpu_custom_call.1} parent=23 // pred_check
          %p203 = pneg %p81
        $region30: #{tpu_custom_call.1} parent=23 // pred_check_branch
          %205 = sbr.rel (%p203) target = $region32
        $region31: #{tpu_custom_call.1} parent=23 // pred_region
          %s206 = sand.u32 %s71, 1
          %s207 = scalar_lea.sflag [#allocation6], %s206
          %s208 = sand.u32 %s71, 1
          %s209 = smul.addr %s208, 64
          %s210 = scalar_lea.vmem [#allocation5], %s209
          %s211 = smul.u32 2, %s27
          %s213 = ssub.s32 1024, 1024
          %214 = vsyncadd %s207, %s213
          %s215 = smul.addr %s26, 8
          %s216 = sadd.s32 %s211, %s215
          %s217 = smul.addr %s216, 128
          %s218 = scalar_lea.hbm %s1, %s217
          %s219 = sshll.u32 %s210, 4
          %s220 = int_to_ptr.vmem [resolvable:$true] %s219
          %225 = dma.hbm_to_vmem [thread:$0]  %s218, 1024, %s220, %s207, 128, 128, 8
        $region32: #{tpu_custom_call.1} parent=23 // pred_fallthru
          _
      $region24: #{tpu_custom_call.1} parent=5 // pred_fallthru
        _
      %p226 = scmp.le.s32.totalorder 1, %s19
      %p227 = scmp.lt.s32.totalorder %s19, 3
      %p228 = pnand %p226, %p227
      %p229 = pneg %p228
      // Predicated region
      $region33: #{tpu_custom_call.1} parent=5 // pred_check
        _
      $region34: #{tpu_custom_call.1} parent=5 // pred_check_branch
        %231 = sbr.rel (%p228) target = $region36
      $region35: #{tpu_custom_call.1} parent=5 // pred_region
        %s232 = ssub.s32 %s19, 1
        %s233 = sand.u32 %s46, 1
        %s234 = scalar_lea.sflag [#allocation3], %s233
        %s235 = sand.u32 %s46, 1
        %s236 = smul.addr %s235, 64
        %s237 = scalar_lea.vmem [#allocation2], %s236
        // Predicated region
        $region37: #{tpu_custom_call.1} parent=35 // pred_check
          %p238 = pneg %p59
        $region38: #{tpu_custom_call.1} parent=35 // pred_check_branch
          %240 = sbr.rel (%p238) target = $region40
        $region39: #{tpu_custom_call.1} parent=35 // pred_region
          %241 = dma.done %s234, 1024
        $region40: #{tpu_custom_call.1} parent=35 // pred_fallthru
          _
        %s242 = sand.u32 %s74, 1
        %s243 = scalar_lea.sflag [#allocation6], %s242
        %s244 = sand.u32 %s74, 1
        %s245 = smul.addr %s244, 64
        %s246 = scalar_lea.vmem [#allocation5], %s245
        // Predicated region
        $region41: #{tpu_custom_call.1} parent=35 // pred_check
          %p247 = pneg %p87
        $region42: #{tpu_custom_call.1} parent=35 // pred_check_branch
          %249 = sbr.rel (%p247) target = $region44
        $region43: #{tpu_custom_call.1} parent=35 // pred_region
          %250 = dma.done %s243, 1024
        $region44: #{tpu_custom_call.1} parent=35 // pred_fallthru
          _
        %s251 = sand.u32 %s46, 1
        %s252 = scalar_lea.sflag [#allocation3], %s251
        %s253 = sand.u32 %s46, 1
        %s254 = smul.addr %s253, 64
        %s255 = scalar_lea.vmem [#allocation2], %s254
        %p256 = pneg %p59
        %p257 = pneg %p56
        %s258 = sand.u32 %s74, 1
        %s259 = scalar_lea.sflag [#allocation6], %s258
        %s260 = sand.u32 %s74, 1
        %s261 = smul.addr %s260, 64
        %s262 = scalar_lea.vmem [#allocation5], %s261
        %p263 = pneg %p87
        %p264 = pneg %p84
        %p265 = pneg %p108
        %p266 = pneg %p105
        %p267 = pneg %p129
        %p268 = pneg %p126
        %p269 = pneg %p155
        %p270 = pneg %p152
        %s271 = sand.u32 %s142, 1
        %s272 = scalar_lea.sflag [#allocation4], %s271
        %s273 = sand.u32 %s142, 1
        %s274 = smul.addr %s273, 4
        %s275 = scalar_lea.vmem [#allocation7], %s274
        %s276 = smul.u32 2, %s29
        %s277 = smul.u32 2, %s29
        %v278 = vld [vmem:[%s237] sm:$0xff]
        %v279 = vld [vmem:[%s237 + $0x8] sm:$0xff]
        %v280 = vld [vmem:[%s237 + $0x10] sm:$0xff]
        %v281 = vld [vmem:[%s237 + $0x18] sm:$0xff]
        %v282 = vld [vmem:[%s237 + $0x20] sm:$0xff]
        %v283 = vld [vmem:[%s237 + $0x28] sm:$0xff]
        %v284 = vld [vmem:[%s237 + $0x30] sm:$0xff]
        %v285 = vld [vmem:[%s237 + $0x38] sm:$0xff]
        %v286 = vld [vmem:[%s246] sm:$0xff]
        %v287 = vld [vmem:[%s246 + $0x8] sm:$0xff]
        %v288 = vld [vmem:[%s246 + $0x10] sm:$0xff]
        %v289 = vld [vmem:[%s246 + $0x18] sm:$0xff]
        %v290 = vld [vmem:[%s246 + $0x20] sm:$0xff]
        %v291 = vld [vmem:[%s246 + $0x28] sm:$0xff]
        %v292 = vld [vmem:[%s246 + $0x30] sm:$0xff]
        %v293 = vld [vmem:[%s246 + $0x38] sm:$0xff]
        %v294 = vsub.f32 %v278, %v286
        %v295 = vsub.f32 %v279, %v287
        %v296 = vsub.f32 %v280, %v288
        %v297 = vsub.f32 %v281, %v289
        %v298 = vsub.f32 %v282, %v290
        %v299 = vsub.f32 %v283, %v291
        %v300 = vsub.f32 %v284, %v292
        %v301 = vsub.f32 %v285, %v293
        %v302 = vld [vmem:[%s2] sm:$0xf]
        %vm303 = vcmask 523264
        %v305 = vsel %vm303, %v302, 0
        %307 = vmatprep.subr.mxu0 0.0
        %308 = vmatpush1.msra.mxu0 %v294
        %309 = vmatprep.subr.mxu0 0.0
        %310 = vmatpush1.msra.mxu0 %v295
        %311 = vmatprep.subr.mxu0 0.0
        %312 = vmatpush1.msra.mxu0 %v296
        %313 = vmatprep.subr.mxu0 0.0
        %314 = vmatpush1.msra.mxu0 %v297
        %315 = vmatprep.subr.mxu0 0.0
        %316 = vmatpush1.msra.mxu0 %v298
        %317 = vmatprep.subr.mxu0 0.0
        %318 = vmatpush1.msra.mxu0 %v299
        %319 = vmatprep.subr.mxu0 0.0
        %320 = vmatpush1.msra.mxu0 %v300
        %321 = vmatprep.subr.mxu0 0.0
        %322 = vmatpush1.msra.mxu0 %v301
        %323 = vmatprep.subr.mxu0 0.0
        %324 = vmatpush1.msra.mxu0 0.0
        %325 = vmatprep.subr.mxu0 0.0
        %326 = vmatpush1.msra.mxu0 0.0
        %327 = vmatprep.subr.mxu0 0.0
        %328 = vmatpush1.msra.mxu0 0.0
        %329 = vmatprep.subr.mxu0 0.0
        %330 = vmatpush1.msra.mxu0 0.0
        %331 = vmatprep.subr.mxu0 0.0
        %332 = vmatpush1.msra.mxu0 0.0
        %333 = vmatprep.subr.mxu0 0.0
        %334 = vmatpush1.msra.mxu0 0.0
        %335 = vmatprep.subr.mxu0 0.0
        %336 = vmatpush1.msra.mxu0 0.0
        %337 = vmatprep.subr.mxu0 0.0
        %338 = vmatpush1.msra.mxu0 0.0
        %339 = vmatprep.subr.mxu0 0.0
        %340 = vmatpush1.msra.mxu0 0.0
        %341 = vmatprep.subr.mxu0 0.0
        %342 = vmatpush1.msra.mxu0 0.0
        %343 = vmatprep.subr.mxu0 0.0
        %344 = vmatpush1.msra.mxu0 0.0
        %345 = vmatprep.subr.mxu0 0.0
        %346 = vmatpush1.msra.mxu0 0.0
        %347 = vmatprep.subr.mxu0 0.0
        %348 = vmatpush1.msra.mxu0 0.0
        %349 = vmatprep.subr.mxu0 0.0
        %350 = vmatpush1.msra.mxu0 0.0
        %351 = vmatprep.subr.mxu0 0.0
        %352 = vmatpush1.msra.mxu0 0.0
        %353 = vmatprep.subr.mxu0 0.0
        %354 = vmatpush1.msra.mxu0 0.0
        %355 = vmatprep.subr.mxu0 0.0
        %356 = vmatpush1.msra.mxu0 0.0
        %357 = vmatprep.subr.mxu0 0.0
        %358 = vmatpush1.msra.mxu0 0.0
        %359 = vmatprep.subr.mxu0 0.0
        %360 = vmatpush1.msra.mxu0 0.0
        %361 = vmatprep.subr.mxu0 0.0
        %362 = vmatpush1.msra.mxu0 0.0
        %363 = vmatprep.subr.mxu0 0.0
        %364 = vmatpush1.msra.mxu0 0.0
        %365 = vmatprep.subr.mxu0 0.0
        %366 = vmatpush1.msra.mxu0 0.0
        %367 = vmatprep.subr.mxu0 0.0
        %368 = vmatpush1.msra.mxu0 0.0
        %369 = vmatprep.subr.mxu0 0.0
        %370 = vmatpush1.msra.mxu0 0.0
        %371 = vmatprep.mubr.f32.mxu0 0.0
        %372 = vmatmul.mubr.f32.gmra.mrb[0].mxu0 %v305
        %v373 = vpop.f32.mrb[0].mxu0
        %v374 = vadd.f32 0.0, %v373
        %v375 = vpop.f32.mrb[0].mxu0
        %376 = vdwg.mxu0
        %v377 = vld [vmem:[%s3] sm:$0xff]
        %v378 = vld [vmem:[%s3 + $0x8] sm:$0xff]
        %vm379 = vcmask 130048
        %v381 = vsel %vm379, %v374, 0
        %383 = vmatprep.subr.mxu0 0.0
        %384 = vmatpush1.msra.mxu0 %v377
        %385 = vmatprep.subr.mxu0 0.0
        %386 = vmatpush1.msra.mxu0 %v378
        %387 = vmatprep.subr.mxu0 0.0
        %388 = vmatpush1.msra.mxu0 0.0
        %389 = vmatprep.subr.mxu0 0.0
        %390 = vmatpush1.msra.mxu0 0.0
        %391 = vmatprep.subr.mxu0 0.0
        %392 = vmatpush1.msra.mxu0 0.0
        %393 = vmatprep.subr.mxu0 0.0
        %394 = vmatpush1.msra.mxu0 0.0
        %395 = vmatprep.subr.mxu0 0.0
        %396 = vmatpush1.msra.mxu0 0.0
        %397 = vmatprep.subr.mxu0 0.0
        %398 = vmatpush1.msra.mxu0 0.0
        %399 = vmatprep.subr.mxu0 0.0
        %400 = vmatpush1.msra.mxu0 0.0
        %401 = vmatprep.subr.mxu0 0.0
        %402 = vmatpush1.msra.mxu0 0.0
        %403 = vmatprep.subr.mxu0 0.0
        %404 = vmatpush1.msra.mxu0 0.0
        %405 = vmatprep.subr.mxu0 0.0
        %406 = vmatpush1.msra.mxu0 0.0
        %407 = vmatprep.subr.mxu0 0.0
        %408 = vmatpush1.msra.mxu0 0.0
        %409 = vmatprep.subr.mxu0 0.0
        %410 = vmatpush1.msra.mxu0 0.0
        %411 = vmatprep.subr.mxu0 0.0
        %412 = vmatpush1.msra.mxu0 0.0
        %413 = vmatprep.subr.mxu0 0.0
        %414 = vmatpush1.msra.mxu0 0.0
        %415 = vmatprep.subr.mxu0 0.0
        %416 = vmatpush1.msra.mxu0 0.0
        %417 = vmatprep.subr.mxu0 0.0
        %418 = vmatpush1.msra.mxu0 0.0
        %419 = vmatprep.subr.mxu0 0.0
        %420 = vmatpush1.msra.mxu0 0.0
        %421 = vmatprep.subr.mxu0 0.0
        %422 = vmatpush1.msra.mxu0 0.0
        %423 = vmatprep.subr.mxu0 0.0
        %424 = vmatpush1.msra.mxu0 0.0
        %425 = vmatprep.subr.mxu0 0.0
        %426 = vmatpush1.msra.mxu0 0.0
        %427 = vmatprep.subr.mxu0 0.0
        %428 = vmatpush1.msra.mxu0 0.0
        %429 = vmatprep.subr.mxu0 0.0
        %430 = vmatpush1.msra.mxu0 0.0
        %431 = vmatprep.subr.mxu0 0.0
        %432 = vmatpush1.msra.mxu0 0.0
        %433 = vmatprep.subr.mxu0 0.0
        %434 = vmatpush1.msra.mxu0 0.0
        %435 = vmatprep.subr.mxu0 0.0
        %436 = vmatpush1.msra.mxu0 0.0
        %437 = vmatprep.subr.mxu0 0.0
        %438 = vmatpush1.msra.mxu0 0.0
        %439 = vmatprep.subr.mxu0 0.0
        %440 = vmatpush1.msra.mxu0 0.0
        %441 = vmatprep.subr.mxu0 0.0
        %442 = vmatpush1.msra.mxu0 0.0
        %443 = vmatprep.subr.mxu0 0.0
        %444 = vmatpush1.msra.mxu0 0.0
        %445 = vmatprep.subr.mxu0 0.0
        %446 = vmatpush1.msra.mxu0 0.0
        %447 = vmatprep.mubr.f32.mxu0 0.0
        %448 = vmatmul.mubr.f32.gmra.mrb[0].mxu0 %v381
        %v449 = vpop.f32.mrb[0].mxu0
        %v450 = vadd.f32 0.0, %v449
        %v451 = vpop.f32.mrb[0].mxu0
        %452 = vdwg.mxu0
        %s453 = smul.u32 %s29, 4
        %s454 = scalar_lea.vmem %s275, %s453 [#allocation7]
        %vm455 = vcmask 27648
        %456 = vst.msk [vmem:[%s454] sm:$0xf] %vm455, %v450
        %p457 = scmp.eq.s32.totalorder %s29, 0
        // Predicated region
        $region45: #{tpu_custom_call.1} parent=35 // pred_check
          %p458 = pneg %p457
        $region46: #{tpu_custom_call.1} parent=35 // pred_check_branch
          %460 = sbr.rel (%p458) target = $region48
        $region47: #{tpu_custom_call.1} parent=35 // pred_region
          %v461 = vld [vmem:[%s275] sm:$0xf]
          %v462 = vlaneseq
          %v463 = vshrl.u32 %v462, 7
          %v464 = vlaneseq
          %v465 = vand.u32 %v464, 127
          %v466 = vsub.s32 %v465, 1
          %vm467 = vcmp.eq.s32.totalorder %v463, %v466
          %v468 = vsel %vm467, 1, 0
          %v469 = vcvt.s32.f32 %v468
          %v470 = vadd.s32 %v465, 1
          %vm471 = vcmp.eq.s32.totalorder %v463, %v470
          %v472 = vsel %vm471, 1, 0
          %v473 = vcvt.s32.f32 %v472
          %v474 = vsub.s32 %v463, 1
          %vm475 = vcmp.eq.s32.totalorder %v465, %v474
          %v476 = vsel %vm475, 1, 0
          %v477 = vcvt.s32.f32 %v476
          %v478 = vadd.s32 %v463, 1
          %vm479 = vcmp.eq.s32.totalorder %v465, %v478
          %v480 = vsel %vm479, 1, 0
          %v481 = vcvt.s32.f32 %v480
          %vm482 = vcmask 31744
          %v484 = vsel %vm482, %v461, 0
          %vm486 = vcmask 1043456
          %v488 = vsel %vm486, %v469, 0
          %490 = vmatprep.subr.mxu0 0.0
          %491 = vmatpush1.msra.mxu0 %v488
          %492 = vmatprep.subr.mxu0 0.0
          %493 = vmatpush1.msra.mxu0 0.0
          %494 = vmatprep.subr.mxu0 0.0
          %495 = vmatpush1.msra.mxu0 0.0
          %496 = vmatprep.subr.mxu0 0.0
          %497 = vmatpush1.msra.mxu0 0.0
          %498 = vmatprep.subr.mxu0 0.0
          %499 = vmatpush1.msra.mxu0 0.0
          %500 = vmatprep.subr.mxu0 0.0
          %501 = vmatpush1.msra.mxu0 0.0
          %502 = vmatprep.subr.mxu0 0.0
          %503 = vmatpush1.msra.mxu0 0.0
          %504 = vmatprep.subr.mxu0 0.0
          %505 = vmatpush1.msra.mxu0 0.0
          %506 = vmatprep.subr.mxu0 0.0
          %507 = vmatpush1.msra.mxu0 0.0
          %508 = vmatprep.subr.mxu0 0.0
          %509 = vmatpush1.msra.mxu0 0.0
          %510 = vmatprep.subr.mxu0 0.0
          %511 = vmatpush1.msra.mxu0 0.0
          %512 = vmatprep.subr.mxu0 0.0
          %513 = vmatpush1.msra.mxu0 0.0
          %514 = vmatprep.subr.mxu0 0.0
          %515 = vmatpush1.msra.mxu0 0.0
          %516 = vmatprep.subr.mxu0 0.0
          %517 = vmatpush1.msra.mxu0 0.0
          %518 = vmatprep.subr.mxu0 0.0
          %519 = vmatpush1.msra.mxu0 0.0
          %520 = vmatprep.subr.mxu0 0.0
          %521 = vmatpush1.msra.mxu0 0.0
          %522 = vmatprep.subr.mxu0 0.0
          %523 = vmatpush1.msra.mxu0 0.0
          %524 = vmatprep.subr.mxu0 0.0
          %525 = vmatpush1.msra.mxu0 0.0
          %526 = vmatprep.subr.mxu0 0.0
          %527 = vmatpush1.msra.mxu0 0.0
          %528 = vmatprep.subr.mxu0 0.0
          %529 = vmatpush1.msra.mxu0 0.0
          %530 = vmatprep.subr.mxu0 0.0
          %531 = vmatpush1.msra.mxu0 0.0
          %532 = vmatprep.subr.mxu0 0.0
          %533 = vmatpush1.msra.mxu0 0.0
          %534 = vmatprep.subr.mxu0 0.0
          %535 = vmatpush1.msra.mxu0 0.0
          %536 = vmatprep.subr.mxu0 0.0
          %537 = vmatpush1.msra.mxu0 0.0
          %538 = vmatprep.subr.mxu0 0.0
          %539 = vmatpush1.msra.mxu0 0.0
          %540 = vmatprep.subr.mxu0 0.0
          %541 = vmatpush1.msra.mxu0 0.0
          %542 = vmatprep.subr.mxu0 0.0
          %543 = vmatpush1.msra.mxu0 0.0
          %544 = vmatprep.subr.mxu0 0.0
          %545 = vmatpush1.msra.mxu0 0.0
          %546 = vmatprep.subr.mxu0 0.0
          %547 = vmatpush1.msra.mxu0 0.0
          %548 = vmatprep.subr.mxu0 0.0
          %549 = vmatpush1.msra.mxu0 0.0
          %550 = vmatprep.subr.mxu0 0.0
          %551 = vmatpush1.msra.mxu0 0.0
          %552 = vmatprep.subr.mxu0 0.0
          %553 = vmatpush1.msra.mxu0 0.0
          %554 = vmatprep.mubr.f32.mxu0 0.0
          %555 = vmatmul.mubr.f32.gmra.mrb[0].mxu0 %v484
          %v556 = vpop.f32.mrb[0].mxu0
          %v557 = vadd.f32 0.0, %v556
          %v558 = vpop.f32.mrb[0].mxu0
          %559 = vdwg.mxu0
          %v561 = vsel %vm486, %v473, 0
          %563 = vmatprep.subr.mxu0 0.0
          %564 = vmatpush1.msra.mxu0 %v561
          %565 = vmatprep.subr.mxu0 0.0
          %566 = vmatpush1.msra.mxu0 0.0
          %567 = vmatprep.subr.mxu0 0.0
          %568 = vmatpush1.msra.mxu0 0.0
          %569 = vmatprep.subr.mxu0 0.0
          %570 = vmatpush1.msra.mxu0 0.0
          %571 = vmatprep.subr.mxu0 0.0
          %572 = vmatpush1.msra.mxu0 0.0
          %573 = vmatprep.subr.mxu0 0.0
          %574 = vmatpush1.msra.mxu0 0.0
          %575 = vmatprep.subr.mxu0 0.0
          %576 = vmatpush1.msra.mxu0 0.0
          %577 = vmatprep.subr.mxu0 0.0
          %578 = vmatpush1.msra.mxu0 0.0
          %579 = vmatprep.subr.mxu0 0.0
          %580 = vmatpush1.msra.mxu0 0.0
          %581 = vmatprep.subr.mxu0 0.0
          %582 = vmatpush1.msra.mxu0 0.0
          %583 = vmatprep.subr.mxu0 0.0
          %584 = vmatpush1.msra.mxu0 0.0
          %585 = vmatprep.subr.mxu0 0.0
          %586 = vmatpush1.msra.mxu0 0.0
          %587 = vmatprep.subr.mxu0 0.0
          %588 = vmatpush1.msra.mxu0 0.0
          %589 = vmatprep.subr.mxu0 0.0
          %590 = vmatpush1.msra.mxu0 0.0
          %591 = vmatprep.subr.mxu0 0.0
          %592 = vmatpush1.msra.mxu0 0.0
          %593 = vmatprep.subr.mxu0 0.0
          %594 = vmatpush1.msra.mxu0 0.0
          %595 = vmatprep.subr.mxu0 0.0
          %596 = vmatpush1.msra.mxu0 0.0
          %597 = vmatprep.subr.mxu0 0.0
          %598 = vmatpush1.msra.mxu0 0.0
          %599 = vmatprep.subr.mxu0 0.0
          %600 = vmatpush1.msra.mxu0 0.0
          %601 = vmatprep.subr.mxu0 0.0
          %602 = vmatpush1.msra.mxu0 0.0
          %603 = vmatprep.subr.mxu0 0.0
          %604 = vmatpush1.msra.mxu0 0.0
          %605 = vmatprep.subr.mxu0 0.0
          %606 = vmatpush1.msra.mxu0 0.0
          %607 = vmatprep.subr.mxu0 0.0
          %608 = vmatpush1.msra.mxu0 0.0
          %609 = vmatprep.subr.mxu0 0.0
          %610 = vmatpush1.msra.mxu0 0.0
          %611 = vmatprep.subr.mxu0 0.0
          %612 = vmatpush1.msra.mxu0 0.0
          %613 = vmatprep.subr.mxu0 0.0
          %614 = vmatpush1.msra.mxu0 0.0
          %615 = vmatprep.subr.mxu0 0.0
          %616 = vmatpush1.msra.mxu0 0.0
          %617 = vmatprep.subr.mxu0 0.0
          %618 = vmatpush1.msra.mxu0 0.0
          %619 = vmatprep.subr.mxu0 0.0
          %620 = vmatpush1.msra.mxu0 0.0
          %621 = vmatprep.subr.mxu0 0.0
          %622 = vmatpush1.msra.mxu0 0.0
          %623 = vmatprep.subr.mxu0 0.0
          %624 = vmatpush1.msra.mxu0 0.0
          %625 = vmatprep.subr.mxu0 0.0
          %626 = vmatpush1.msra.mxu0 0.0
          %627 = vmatprep.mubr.f32.mxu0 0.0
          %628 = vmatmul.mubr.f32.gmra.mrb[0].mxu0 %v484
          %v629 = vpop.f32.mrb[0].mxu0
          %v630 = vadd.f32 0.0, %v629
          %v631 = vpop.f32.mrb[0].mxu0
          %632 = vdwg.mxu0
          %v634 = vsel %vm482, %v477, 0
          %v636 = vsel %vm486, %v461, 0
          %638 = vmatprep.subr.mxu0 0.0
          %639 = vmatpush1.msra.mxu0 %v636
          %640 = vmatprep.subr.mxu0 0.0
          %641 = vmatpush1.msra.mxu0 0.0
          %642 = vmatprep.subr.mxu0 0.0
          %643 = vmatpush1.msra.mxu0 0.0
          %644 = vmatprep.subr.mxu0 0.0
          %645 = vmatpush1.msra.mxu0 0.0
          %646 = vmatprep.subr.mxu0 0.0
          %647 = vmatpush1.msra.mxu0 0.0
          %648 = vmatprep.subr.mxu0 0.0
          %649 = vmatpush1.msra.mxu0 0.0
          %650 = vmatprep.subr.mxu0 0.0
          %651 = vmatpush1.msra.mxu0 0.0
          %652 = vmatprep.subr.mxu0 0.0
          %653 = vmatpush1.msra.mxu0 0.0
          %654 = vmatprep.subr.mxu0 0.0
          %655 = vmatpush1.msra.mxu0 0.0
          %656 = vmatprep.subr.mxu0 0.0
          %657 = vmatpush1.msra.mxu0 0.0
          %658 = vmatprep.subr.mxu0 0.0
          %659 = vmatpush1.msra.mxu0 0.0
          %660 = vmatprep.subr.mxu0 0.0
          %661 = vmatpush1.msra.mxu0 0.0
          %662 = vmatprep.subr.mxu0 0.0
          %663 = vmatpush1.msra.mxu0 0.0
          %664 = vmatprep.subr.mxu0 0.0
          %665 = vmatpush1.msra.mxu0 0.0
          %666 = vmatprep.subr.mxu0 0.0
          %667 = vmatpush1.msra.mxu0 0.0
          %668 = vmatprep.subr.mxu0 0.0
          %669 = vmatpush1.msra.mxu0 0.0
          %670 = vmatprep.subr.mxu0 0.0
          %671 = vmatpush1.msra.mxu0 0.0
          %672 = vmatprep.subr.mxu0 0.0
          %673 = vmatpush1.msra.mxu0 0.0
          %674 = vmatprep.subr.mxu0 0.0
          %675 = vmatpush1.msra.mxu0 0.0
          %676 = vmatprep.subr.mxu0 0.0
          %677 = vmatpush1.msra.mxu0 0.0
          %678 = vmatprep.subr.mxu0 0.0
          %679 = vmatpush1.msra.mxu0 0.0
          %680 = vmatprep.subr.mxu0 0.0
          %681 = vmatpush1.msra.mxu0 0.0
          %682 = vmatprep.subr.mxu0 0.0
          %683 = vmatpush1.msra.mxu0 0.0
          %684 = vmatprep.subr.mxu0 0.0
          %685 = vmatpush1.msra.mxu0 0.0
          %686 = vmatprep.subr.mxu0 0.0
          %687 = vmatpush1.msra.mxu0 0.0
          %688 = vmatprep.subr.mxu0 0.0
          %689 = vmatpush1.msra.mxu0 0.0
          %690 = vmatprep.subr.mxu0 0.0
          %691 = vmatpush1.msra.mxu0 0.0
          %692 = vmatprep.subr.mxu0 0.0
          %693 = vmatpush1.msra.mxu0 0.0
          %694 = vmatprep.subr.mxu0 0.0
          %695 = vmatpush1.msra.mxu0 0.0
          %696 = vmatprep.subr.mxu0 0.0
          %697 = vmatpush1.msra.mxu0 0.0
          %698 = vmatprep.subr.mxu0 0.0
          %699 = vmatpush1.msra.mxu0 0.0
          %700 = vmatprep.subr.mxu0 0.0
          %701 = vmatpush1.msra.mxu0 0.0
          %702 = vmatprep.mubr.f32.mxu0 0.0
          %703 = vmatmul.mubr.f32.gmra.mrb[0].mxu0 %v634
          %v704 = vpop.f32.mrb[0].mxu0
          %v705 = vadd.f32 0.0, %v704
          %v706 = vpop.f32.mrb[0].mxu0
          %707 = vdwg.mxu0
          %v709 = vsel %vm482, %v481, 0
          %711 = vmatprep.subr.mxu0 0.0
          %712 = vmatpush1.msra.mxu0 %v636
          %713 = vmatprep.subr.mxu0 0.0
          %714 = vmatpush1.msra.mxu0 0.0
          %715 = vmatprep.subr.mxu0 0.0
          %716 = vmatpush1.msra.mxu0 0.0
          %717 = vmatprep.subr.mxu0 0.0
          %718 = vmatpush1.msra.mxu0 0.0
          %719 = vmatprep.subr.mxu0 0.0
          %720 = vmatpush1.msra.mxu0 0.0
          %721 = vmatprep.subr.mxu0 0.0
          %722 = vmatpush1.msra.mxu0 0.0
          %723 = vmatprep.subr.mxu0 0.0
          %724 = vmatpush1.msra.mxu0 0.0
          %725 = vmatprep.subr.mxu0 0.0
          %726 = vmatpush1.msra.mxu0 0.0
          %727 = vmatprep.subr.mxu0 0.0
          %728 = vmatpush1.msra.mxu0 0.0
          %729 = vmatprep.subr.mxu0 0.0
          %730 = vmatpush1.msra.mxu0 0.0
          %731 = vmatprep.subr.mxu0 0.0
          %732 = vmatpush1.msra.mxu0 0.0
          %733 = vmatprep.subr.mxu0 0.0
          %734 = vmatpush1.msra.mxu0 0.0
          %735 = vmatprep.subr.mxu0 0.0
          %736 = vmatpush1.msra.mxu0 0.0
          %737 = vmatprep.subr.mxu0 0.0
          %738 = vmatpush1.msra.mxu0 0.0
          %739 = vmatprep.subr.mxu0 0.0
          %740 = vmatpush1.msra.mxu0 0.0
          %741 = vmatprep.subr.mxu0 0.0
          %742 = vmatpush1.msra.mxu0 0.0
          %743 = vmatprep.subr.mxu0 0.0
          %744 = vmatpush1.msra.mxu0 0.0
          %745 = vmatprep.subr.mxu0 0.0
          %746 = vmatpush1.msra.mxu0 0.0
          %747 = vmatprep.subr.mxu0 0.0
          %748 = vmatpush1.msra.mxu0 0.0
          %749 = vmatprep.subr.mxu0 0.0
          %750 = vmatpush1.msra.mxu0 0.0
          %751 = vmatprep.subr.mxu0 0.0
          %752 = vmatpush1.msra.mxu0 0.0
          %753 = vmatprep.subr.mxu0 0.0
          %754 = vmatpush1.msra.mxu0 0.0
          %755 = vmatprep.subr.mxu0 0.0
          %756 = vmatpush1.msra.mxu0 0.0
          %757 = vmatprep.subr.mxu0 0.0
          %758 = vmatpush1.msra.mxu0 0.0
          %759 = vmatprep.subr.mxu0 0.0
          %760 = vmatpush1.msra.mxu0 0.0
          %761 = vmatprep.subr.mxu0 0.0
          %762 = vmatpush1.msra.mxu0 0.0
          %763 = vmatprep.subr.mxu0 0.0
          %764 = vmatpush1.msra.mxu0 0.0
          %765 = vmatprep.subr.mxu0 0.0
          %766 = vmatpush1.msra.mxu0 0.0
          %767 = vmatprep.subr.mxu0 0.0
          %768 = vmatpush1.msra.mxu0 0.0
          %769 = vmatprep.subr.mxu0 0.0
          %770 = vmatpush1.msra.mxu0 0.0
          %771 = vmatprep.subr.mxu0 0.0
          %772 = vmatpush1.msra.mxu0 0.0
          %773 = vmatprep.subr.mxu0 0.0
          %774 = vmatpush1.msra.mxu0 0.0
          %775 = vmatprep.mubr.f32.mxu0 0.0
          %776 = vmatmul.mubr.f32.gmra.mrb[0].mxu0 %v709
          %v777 = vpop.f32.mrb[0].mxu0
          %v778 = vadd.f32 0.0, %v777
          %v779 = vpop.f32.mrb[0].mxu0
          %780 = vdwg.mxu0
          %v781 = vsub.f32 %v461, %v557
          %v782 = vmul.f32 %v781, %v781
          %v783 = vsub.f32 %v461, %v630
          %v784 = vmul.f32 %v783, %v783
          %v785 = vadd.f32 %v782, %v784
          %v786 = vsub.f32 %v461, %v705
          %v787 = vmul.f32 %v786, %v786
          %v788 = vadd.f32 %v785, %v787
          %v789 = vsub.f32 %v461, %v778
          %v790 = vmul.f32 %v789, %v789
          %v791 = vadd.f32 %v788, %v790
          %792 = vst.msk [vmem:[%s275] sm:$0xf] %vm455, %v791
        $region48: #{tpu_custom_call.1} parent=35 // pred_fallthru
          _
        %s793 = sand.u32 %s142, 1
        %s794 = scalar_lea.sflag [#allocation4], %s793
        %s795 = sand.u32 %s142, 1
        %s796 = smul.addr %s795, 4
        %s797 = scalar_lea.vmem [#allocation7], %s796
        // Predicated region
        $region49: #{tpu_custom_call.1} parent=35 // pred_check
          %p798 = pneg %p152
        $region50: #{tpu_custom_call.1} parent=35 // pred_check_branch
          %800 = sbr.rel (%p798) target = $region52
        $region51: #{tpu_custom_call.1} parent=35 // pred_region
          %s802 = ssub.s32 64, 64
          %803 = vsyncadd %s794, %s802
          %s804 = smul.addr %s28, 64
          %s805 = scalar_lea.hbm %s4, %s804
          %s807 = sshll.u32 %s797, 4
          %s808 = int_to_ptr.vmem [resolvable:$true] %s807
          %810 = dma.vmem_to_hbm [thread:$0]  %s808, 64, %s805, %s794
        $region52: #{tpu_custom_call.1} parent=35 // pred_fallthru
          _
      $region36: #{tpu_custom_call.1} parent=5 // pred_fallthru
        _
      %p811 = scmp.le.s32.totalorder 2, %s19
      // Predicated region
      $region53: #{tpu_custom_call.1} parent=5 // pred_check
        %p812 = pneg %p811
      $region54: #{tpu_custom_call.1} parent=5 // pred_check_branch
        %814 = sbr.rel (%p812) target = $region56
      $region55: #{tpu_custom_call.1} parent=5 // pred_region
        %s815 = ssub.s32 %s19, 2
        // Predicated region
        $region57: #{tpu_custom_call.1} parent=55 // pred_check
          %p816 = pneg %p158
        $region58: #{tpu_custom_call.1} parent=55 // pred_check_branch
          %818 = sbr.rel (%p816) target = $region60
        $region59: #{tpu_custom_call.1} parent=55 // pred_region
          %s819 = sand.u32 %s143, 1
          %s820 = scalar_lea.sflag [#allocation4], %s819
          %s821 = sand.u32 %s143, 1
          %s822 = smul.addr %s821, 4
          %s823 = scalar_lea.vmem [#allocation7], %s822
          %824 = dma.done %s820, 64
        $region60: #{tpu_custom_call.1} parent=55 // pred_fallthru
          _
      $region56: #{tpu_custom_call.1} parent=5 // pred_fallthru
        _
    $region6: #{tpu_custom_call.1} parent=1 // loop_footer
      %s23 = sadd.s32 1, %s19
    $region7: #{tpu_custom_call.1} parent=1 // loop_footer_branch
      %18 = sbr.rel target = $region3
    $region8: #{tpu_custom_call.1} parent=1 // loop_exit
      _
    %825 = vsyncpa [#allocation3], 1
    %s826 = scalar_lea.sflag [#allocation3], 1
    %827 = vsyncpa %s826, 1
    %828 = vsyncpa [#allocation6], 1
    %s829 = scalar_lea.sflag [#allocation6], 1
    %830 = vsyncpa %s829, 1
    %831 = vsyncpa [#allocation4], 1
    %s832 = scalar_lea.sflag [#allocation4], 1
    %833 = vsyncpa %s832, 1

</llo_original>
